<compile_context>
chip_gen: v5e
topology: v5e:2x2
jax: 0.10.0
libtpu: 0.0.40
codegen_flags: <defaults>
</compile_context>

<pallas_src>
import jax
import jax.numpy as jnp
from jax.experimental import pallas as pl
from jax.experimental.pallas import tpu as pltpu

LANES = 128          # vreg lane width (last dim of the lane-dense slab)
MAX_TR = 1024        # rows per tile -> 1024*128*4B = 512 KiB per f32 buffer
MIN_PALLAS_ELEMS = 1024  # below this, plain jnp (XLA fuses) is strictly better


def _affine_kernel(w_ref, b_ref, x_ref, o_ref):
    # w_ref, b_ref: (1,) f32 scalars in SMEM (scalar load path, no VMEM DMA)
    # x_ref, o_ref: (TR, 128) lane-dense tiles in VMEM
    w = w_ref[0]
    b = b_ref[0]
    o_ref[...] = (x_ref[...].astype(jnp.float32) * w + b).astype(o_ref.dtype)


def linear_1x1(x, weight, bias):
    """nn.Linear(1, 1) forward.

    x: (..., 1) array; weight: (1, 1); bias: (1,).  Returns same shape as x.
    """
    orig_shape = x.shape
    dtype = x.dtype
    n = x.size

    w_scalar = weight.reshape(()).astype(jnp.float32)
    b_scalar = bias.reshape(()).astype(jnp.float32)

    # Tiny-input fast path: launch overhead dwarfs 8 FMAs; let XLA fuse it.
    if n < MIN_PALLAS_ELEMS:
        return (x.astype(jnp.float32) * w_scalar + b_scalar).astype(dtype)

    # --- lane-dense slab: flatten, pad, view as (rows, 128) ---------------
    rows = pl.cdiv(n, LANES)
    rows = pl.cdiv(rows, 8) * 8                 # sublane-align (multiple of 8)
    tr = min(MAX_TR, rows)                      # rows per tile
    rows_padded = pl.cdiv(rows, tr) * tr        # whole number of tiles
    n_pad = rows_padded * LANES

    xf = x.reshape(-1)
    if n_pad != n:
        xf = jnp.pad(xf, (0, n_pad - n))
    x2d = xf.reshape(rows_padded, LANES)

    grid = (rows_padded // tr,)

    y2d = pl.pallas_call(
        _affine_kernel,
        out_shape=jax.ShapeDtypeStruct((rows_padded, LANES), dtype),
        grid=grid,
        in_specs=[
            pl.BlockSpec(memory_space=pltpu.MemorySpace.SMEM),   # weight scalar
            pl.BlockSpec(memory_space=pltpu.MemorySpace.SMEM),   # bias scalar
            pl.BlockSpec((tr, LANES), lambda i: (i, 0)),         # x tile
        ],
        out_specs=pl.BlockSpec((tr, LANES), lambda i: (i, 0)),   # y tile
        compiler_params=pltpu.CompilerParams(
            dimension_semantics=("parallel",),
        ),
    )(w_scalar.reshape(1), b_scalar.reshape(1), x2d)

    return y2d.reshape(-1)[:n].reshape(orig_shape)


if __name__ == "__main__":
    key = jax.random.PRNGKey(0)
    kx1, kx2, kx3, kw, kb = jax.random.split(key, 5)

    # nn.Linear(1, 1) parameters: weight (1, 1), bias (1,)
    weight = jax.random.uniform(kw, (1, 1), jnp.float32, minval=-1.0, maxval=1.0)
    bias = jax.random.uniform(kb, (1,), jnp.float32, minval=-1.0, maxval=1.0)

    def ref(x):
        return x @ weight.T + bias

    # 1) tiny batch (fallback path — no Pallas launch for 8 elements)
    x_small = jax.random.normal(kx1, (8, 1), jnp.float32)
    y_small = linear_1x1(x_small, weight, bias)
    jax.block_until_ready(y_small)
    assert y_small.shape == x_small.shape
    assert jnp.allclose(y_small, ref(x_small), atol=1e-5)

    # 2) Pallas path, single tile (4096 elements -> (32, 128) slab)
    x_mid = jax.random.normal(kx2, (4096, 1), jnp.float32)
    y_mid = linear_1x1(x_mid, weight, bias)
    jax.block_until_ready(y_mid)
    assert y_mid.shape == x_mid.shape
    assert jnp.allclose(y_mid, ref(x_mid), atol=1e-5)

    # 3) Pallas path, multi-tile grid + padding (200000 elements)
    x_big = jax.random.normal(kx3, (200000, 1), jnp.float32)
    y_big = linear_1x1(x_big, weight, bias)
    jax.block_until_ready(y_big)
    assert y_big.shape == x_big.shape
    assert jnp.allclose(y_big, ref(x_big), atol=1e-5)

    print("KERNEL_OK")
</pallas_src>

<mosaic_0001>
module attributes {stable_mosaic.version = 11 : i64} {
  func.func @_affine_kernel(%arg0: i32, %arg1: memref<1xf32, #tpu.memory_space<smem>>, %arg2: memref<1xf32, #tpu.memory_space<smem>>, %arg3: memref<32x128xf32, #tpu.memory_space<vmem>>, %arg4: memref<32x128xf32, #tpu.memory_space<vmem>>) attributes {dimension_semantics = [#tpu.dimension_semantics<parallel>], iteration_bounds = array<i64: 1>, scalar_prefetch = 0 : i64, scratch_operands = 0 : i64, tpu.core_type = #tpu.core_type<tc>, window_params = [{transform_indices = @transform_0, window_bounds = array<i64: 1>}, {transform_indices = @transform_1, window_bounds = array<i64: 1>}, {transform_indices = @transform_2, window_bounds = array<i64: 32, 128>}, {transform_indices = @transform_3, window_bounds = array<i64: 32, 128>}]} {
    %c0 = arith.constant 0 : index
    %0 = memref.load %arg1[%c0] : memref<1xf32, #tpu.memory_space<smem>>
    %c0_0 = arith.constant 0 : index
    %1 = memref.load %arg2[%c0_0] : memref<1xf32, #tpu.memory_space<smem>>
    %c0_1 = arith.constant 0 : index
    %c0_2 = arith.constant 0 : index
    %2 = vector.load %arg3[%c0_1, %c0_2] : memref<32x128xf32, #tpu.memory_space<vmem>>, vector<32x128xf32>
    %3 = vector.broadcast %0 : f32 to vector<32x128xf32>
    %4 = arith.mulf %2, %3 : vector<32x128xf32>
    %5 = vector.broadcast %1 : f32 to vector<32x128xf32>
    %6 = arith.addf %4, %5 : vector<32x128xf32>
    %c0_3 = arith.constant 0 : index
    %c0_4 = arith.constant 0 : index
    %7 = vector.load %arg4[%c0_3, %c0_4] : memref<32x128xf32, #tpu.memory_space<vmem>>, vector<32x128xf32>
    tpu.vector_store %arg4[%c0_3, %c0_4], %6 {strides = array<i32>} : memref<32x128xf32, #tpu.memory_space<vmem>>, vector<32x128xf32>,
    return
  }
  func.func @transform_0(%arg0: i32) -> i32 {
    %c0_i32 = arith.constant 0 : i32
    %c0_i32_0 = arith.constant 0 : i32
    return %c0_i32 : i32
  }
  func.func @transform_1(%arg0: i32) -> i32 {
    %c0_i32 = arith.constant 0 : i32
    %c0_i32_0 = arith.constant 0 : i32
    return %c0_i32 : i32
  }
  func.func @transform_2(%arg0: i32) -> (i32, i32) {
    %c0_i32 = arith.constant 0 : i32
    %c0_i32_0 = arith.constant 0 : i32
    return %arg0, %c0_i32 : i32, i32
  }
  func.func @transform_3(%arg0: i32) -> (i32, i32) {
    %c0_i32 = arith.constant 0 : i32
    %c0_i32_0 = arith.constant 0 : i32
    return %arg0, %c0_i32 : i32, i32
  }
}

</mosaic_0001>

<llo_original>
// kernel: tpu_custom_call.1
$region0: #{tpu_custom_call.1}
  #allocation0 [shape = 'u32[]', space=smem, size = 0x4, offset = 0x4, fixed_abs, tag = 'smem constant byte address 0x4 - core index']
  #allocation1 [shape = 'u32[72,128]{1,0:T(1,128)}', space=vmem, size = 0x9000, scoped, tag = 'internal scratch']
  #allocation2 [shape = 'f32[1]{0:T(128)S(6)}', space=smem, size = 0x200, scoped, tag = 'scoped memory for tpu_custom_call.1']
  #allocation3 [shape = 'f32[1]{0:T(128)S(6)}', space=smem, size = 0x200, scoped, tag = 'scoped memory for tpu_custom_call.1']
  %s0 = inlined_call_operand.<no memory space> [shape: f32[1], index: 0, kind: input, shape index: {}]
  %s1 = inlined_call_operand.<no memory space> [shape: f32[1], index: 1, kind: input, shape index: {}]
  %s2 = inlined_call_operand.hbm [shape: f32[32,128], index: 2, kind: input, shape index: {}]
  %s3 = inlined_call_operand.hbm [shape: f32[32,128], index: 3, kind: output, shape index: {}]
  %s4 = sld [smem:[#allocation0]]
  $region26: #{tpu_custom_call.1} parent=0
    _
  %s6 = ssub.s32 1, %s4
  %s7 = scalar_select 0, %s6, %s4
  %8 = sst [smem:[#allocation2]] %s0
  %9 = sst [smem:[#allocation3]] %s1
  $region1: #{tpu_custom_call.1} parent=0
    #allocation4 [shape = 'u8[16384]{0}', space=vmem, size = 0x4000, scoped, tag = 'input window, operand 2, single buffered']
    #allocation5 [shape = 's32[1]{0}', space=sflag, size = 0x4, scoped, tag = 'scoped memory for tpu_custom_call.1']
    #allocation6 [shape = 's32[1]{0}', space=sflag, size = 0x4, scoped, tag = 'scoped memory for tpu_custom_call.1']
    #allocation7 [shape = 'u8[16384]{0}', space=vmem, size = 0x4000, scoped, tag = 'output window, operand 0, single buffered']
    %10 = vsyncpa [#allocation5], 0
    %11 = vsyncpa [#allocation6], 0
    // Predicated region
    $region2: #{tpu_custom_call.1} parent=1 // pred_check
      _
    $region3: #{tpu_custom_call.1} parent=1 // pred_check_branch
      %13 = sbr.rel (0) target = $region5
    $region4: #{tpu_custom_call.1} parent=1 // pred_region
      _
    $region5: #{tpu_custom_call.1} parent=1 // pred_fallthru
      _
    // Predicated region
    $region6: #{tpu_custom_call.1} parent=1 // pred_check
      _
    $region7: #{tpu_custom_call.1} parent=1 // pred_check_branch
      %15 = sbr.rel (0) target = $region9
    $region8: #{tpu_custom_call.1} parent=1 // pred_region
      _
    $region9: #{tpu_custom_call.1} parent=1 // pred_fallthru
      _
    // Predicated region
    $region10: #{tpu_custom_call.1} parent=1 // pred_check
      _
    $region11: #{tpu_custom_call.1} parent=1 // pred_check_branch
      %17 = sbr.rel (0) target = $region13
    $region12: #{tpu_custom_call.1} parent=1 // pred_region
      %19 = vsyncadd [#allocation5], 0
      %s20 = sshll.u32 %s2, 4
      %s21 = int_to_ptr.hbm [resolvable:$true] %s20
      %s22 = sshll.u32 [#allocation4], 4
      %s23 = int_to_ptr.vmem [resolvable:$true] %s22
      %28 = dma.hbm_to_vmem [thread:$0]  %s21, 512, %s23, [#allocation5], 128, 128, 8
    $region13: #{tpu_custom_call.1} parent=1 // pred_fallthru
      _
    // Predicated region
    $region14: #{tpu_custom_call.1} parent=1 // pred_check
      _
    $region15: #{tpu_custom_call.1} parent=1 // pred_check_branch
      %30 = sbr.rel (0) target = $region17
    $region16: #{tpu_custom_call.1} parent=1 // pred_region
      %32 = dma.done [#allocation5], 512
    $region17: #{tpu_custom_call.1} parent=1 // pred_fallthru
      _
    %s33 = sld [smem:[#allocation2]]
    %s34 = sld [smem:[#allocation3]]
    %v35 = vld [vmem:[#allocation4] sm:$0xff]
    %v36 = vld [vmem:[#allocation4 + $0x8] sm:$0xff]
    %v37 = vld [vmem:[#allocation4 + $0x10] sm:$0xff]
    %v38 = vld [vmem:[#allocation4 + $0x18] sm:$0xff]
    %v39 = vstv %s33
    %v40 = vmul.f32 %v35, %v39
    %v41 = vmul.f32 %v36, %v39
    %v42 = vmul.f32 %v37, %v39
    %v43 = vmul.f32 %v38, %v39
    %v44 = vstv %s34
    %v45 = vadd.f32 %v40, %v44
    %v46 = vadd.f32 %v41, %v44
    %v47 = vadd.f32 %v42, %v44
    %v48 = vadd.f32 %v43, %v44
    %49 = vst [vmem:[#allocation7] sm:$0xff] %v45
    %50 = vst [vmem:[#allocation7 + $0x8] sm:$0xff] %v46
    %51 = vst [vmem:[#allocation7 + $0x10] sm:$0xff] %v47
    %52 = vst [vmem:[#allocation7 + $0x18] sm:$0xff] %v48
    // Predicated region
    $region18: #{tpu_custom_call.1} parent=1 // pred_check
      _
    $region19: #{tpu_custom_call.1} parent=1 // pred_check_branch
      %54 = sbr.rel (0) target = $region21
    $region20: #{tpu_custom_call.1} parent=1 // pred_region
      %56 = vsyncadd [#allocation6], 0
      %s57 = sshll.u32 [#allocation7], 4
      %s58 = int_to_ptr.vmem [resolvable:$true] %s57
      %s59 = sshll.u32 %s3, 4
      %s60 = int_to_ptr.hbm [resolvable:$true] %s59
      %65 = dma.vmem_to_hbm [thread:$0]  %s58, 512, %s60, [#allocation6], 128, 128, 8
    $region21: #{tpu_custom_call.1} parent=1 // pred_fallthru
      _
    // Predicated region
    $region22: #{tpu_custom_call.1} parent=1 // pred_check
      _
    $region23: #{tpu_custom_call.1} parent=1 // pred_check_branch
      %67 = sbr.rel (0) target = $region25
    $region24: #{tpu_custom_call.1} parent=1 // pred_region
      %69 = dma.done [#allocation6], 512
    $region25: #{tpu_custom_call.1} parent=1 // pred_fallthru
      _
    %70 = vsyncpa [#allocation5], 1
    %71 = vsyncpa [#allocation6], 1

</llo_original>
